<compile_context>
chip_gen: v7x
topology: tpu7x:2x2x1
jax: 0.10.0
libtpu: 0.0.40
codegen_flags: <defaults>
</compile_context>

<pallas_src>
import math
from functools import partial

import jax
import jax.numpy as jnp
from jax.experimental import pallas as pl
from jax.experimental.pallas import tpu as pltpu

# Scoped-VMEM cap: above the 32 MiB default (bigger row tiles on v5e/v6e) but
# comfortably inside v7x's 64 MiB/TC physical VMEM.
_VMEM_LIMIT = 48 * 1024 * 1024


def _row_tile(m, target=1024):
    """Largest multiple-of-8 divisor of m that is <= target and keeps >=2 grid steps."""
    cap = min(target, m)
    cap -= cap % 8
    for cand in range(cap, 7, -8):
        if m % cand == 0 and m // cand >= 2:
            return cand
    for cand in range(cap, 7, -8):
        if m % cand == 0:
            return cand
    return m  # awkward M: fall back to a single whole-array block


# ----------------------------------------------------------------------------
# Kernels
# ----------------------------------------------------------------------------
def _ln_qkv_kernel(x_ref, g_ref, be_ref, wq_ref, bq_ref, wk_ref, bk_ref,
                   wv_ref, bv_ref, q_ref, k_ref, v_ref, *, eps):
    # Fused LayerNorm + QKV projection on a (TM, C) row tile, three outputs.
    x = x_ref[...]
    mu = jnp.mean(x, axis=-1, keepdims=True)
    var = jnp.mean(jnp.square(x - mu), axis=-1, keepdims=True)
    xn = (x - mu) * jax.lax.rsqrt(var + eps) * g_ref[...] + be_ref[...]
    xb = xn.astype(jnp.bfloat16)
    q_ref[...] = (jnp.dot(xb, wq_ref[...], preferred_element_type=jnp.float32)
                  + bq_ref[...]).astype(q_ref.dtype)
    k_ref[...] = (jnp.dot(xb, wk_ref[...], preferred_element_type=jnp.float32)
                  + bk_ref[...]).astype(k_ref.dtype)
    v_ref[...] = (jnp.dot(xb, wv_ref[...], preferred_element_type=jnp.float32)
                  + bv_ref[...]).astype(v_ref.dtype)


def _attn_proj_kernel(q_ref, bias_ref, wproj_ref, bproj_ref, kp_hbm, vp_hbm,
                      o_ref, kbuf, vbuf, sem, *, ws, ows, nh, nwh, nww):
    # One overlapping window per grid step.
    #   q_ref:    (nq, C) bf16 window of queries (scale folded into W_q)
    #   bias_ref: (nh, nq, nk) f32 relative-position bias
    #   kp_hbm/vp_hbm: (B, H+2p, W+2p, C) bf16 padded K/V in HBM (manual DMA)
    #   o_ref:    (nq, C) bf16  = proj(attention output) for this window
    c = q_ref.shape[-1]
    d = c // nh
    i = pl.program_id(0)
    nsteps = pl.num_programs(0)
    slot = i % 2

    def kv_copies(widx, s_):
        bi = widx // (nwh * nww)
        wi = (widx // nww) % nwh
        wj = widx % nww
        r0 = wi * ws            # row start in the padded tensor
        c0 = wj * ws            # col start in the padded tensor
        cps = []
        for r in range(ows):    # one strided row DMA per overlapping-window row
            cps.append(pltpu.make_async_copy(
                kp_hbm.at[bi, r0 + r, pl.ds(c0, ows), :],
                kbuf.at[s_, pl.ds(r * ows, ows), :],
                sem.at[s_, 0]))
            cps.append(pltpu.make_async_copy(
                vp_hbm.at[bi, r0 + r, pl.ds(c0, ows), :],
                vbuf.at[s_, pl.ds(r * ows, ows), :],
                sem.at[s_, 1]))
        return cps

    @pl.when(i == 0)
    def _prime():
        for cp in kv_copies(i, slot):
            cp.start()

    @pl.when(i + 1 < nsteps)
    def _prefetch_next():
        for cp in kv_copies(i + 1, 1 - slot):
            cp.start()

    for cp in kv_copies(i, slot):
        cp.wait()

    q2 = q_ref[...]            # (nq, C)  bf16, lane-dense
    k2 = kbuf[slot]            # (nk, C)  bf16, lane-dense
    v2 = vbuf[slot]            # (nk, C)

    dn = (((1,), (1,)), ((), ()))  # contract head-dim axis of both operands
    acc = jnp.zeros((q2.shape[0], c), jnp.float32)
    for hh in range(nh):
        sl = slice(hh * d, (hh + 1) * d)
        s = jax.lax.dot_general(q2[:, sl], k2[:, sl], dn,
                                preferred_element_type=jnp.float32)  # (nq, nk)
        s = s + bias_ref[hh]
        s = s - jnp.max(s, axis=-1, keepdims=True)
        p = jnp.exp(s)
        p = p * pl.reciprocal(jnp.sum(p, axis=-1, keepdims=True), approx=True)
        oh = jnp.dot(p.astype(jnp.bfloat16), v2[:, sl],
                     preferred_element_type=jnp.float32)             # (nq, d)
        # fused output projection: concat over heads folded into an accumulation
        acc = acc + jnp.dot(oh.astype(jnp.bfloat16), wproj_ref[sl, :],
                            preferred_element_type=jnp.float32)      # (nq, C)
    o_ref[...] = (acc + bproj_ref[...]).astype(o_ref.dtype)


def _ln_mlp_residual_kernel(xw_ref, sc_ref, g_ref, be_ref, w1_ref, b1_ref,
                            w2_ref, b2_ref, o_ref, *, eps):
    # Fused (attn + shortcut residual) + LayerNorm + MLP(GELU) + residual.
    x1 = xw_ref[...].astype(jnp.float32) + sc_ref[...]
    mu = jnp.mean(x1, axis=-1, keepdims=True)
    var = jnp.mean(jnp.square(x1 - mu), axis=-1, keepdims=True)
    xn = (x1 - mu) * jax.lax.rsqrt(var + eps) * g_ref[...] + be_ref[...]
    h = jnp.dot(xn.astype(jnp.bfloat16), w1_ref[...],
                preferred_element_type=jnp.float32) + b1_ref[...]
    # tanh-GELU (EUP) -- negligible deviation from the erf form, see TODO above.
    h = 0.5 * h * (1.0 + jnp.tanh(0.7978845608028654 * (h + 0.044715 * h * h * h)))
    o_ref[...] = x1 + jnp.dot(h.astype(jnp.bfloat16), w2_ref[...],
                              preferred_element_type=jnp.float32) + b2_ref[...]


# ----------------------------------------------------------------------------
# pallas_call wrappers
# ----------------------------------------------------------------------------
def pallas_ln_qkv(x, gamma, beta, w_q, b_q, w_k, b_k, w_v, b_v, eps=1e-5):
    M, C = x.shape
    tm = _row_tile(M)
    rows = pl.BlockSpec((tm, C), lambda i: (i, 0))
    vec = pl.BlockSpec((1, C), lambda i: (0, 0))
    wmat = pl.BlockSpec((C, C), lambda i: (0, 0))
    return pl.pallas_call(
        partial(_ln_qkv_kernel, eps=eps),
        grid=(M // tm,),
        in_specs=[rows, vec, vec, wmat, vec, wmat, vec, wmat, vec],
        out_specs=[rows, rows, rows],
        out_shape=(jax.ShapeDtypeStruct((M, C), jnp.bfloat16),
                   jax.ShapeDtypeStruct((M, C), jnp.bfloat16),
                   jax.ShapeDtypeStruct((M, C), jnp.bfloat16)),
        compiler_params=pltpu.CompilerParams(
            dimension_semantics=("parallel",), vmem_limit_bytes=_VMEM_LIMIT),
    )(x, gamma.reshape(1, C), beta.reshape(1, C), w_q, b_q, w_k, b_k, w_v, b_v)


def pallas_window_attention_proj(q_win, kpad, vpad, rpb, w_proj, b_proj,
                                 *, ws, ows, nh, nwh, nww):
    # q_win: (b_*nq, C) bf16 window-partitioned queries
    # kpad/vpad: (B, H+2p, W+2p, C) bf16, gathered in-kernel via manual DMA
    b_tot = kpad.shape[0] * nwh * nww
    nq, nk = ws * ws, ows * ows
    c = q_win.shape[-1]
    kernel = partial(_attn_proj_kernel, ws=ws, ows=ows, nh=nh, nwh=nwh, nww=nww)
    return pl.pallas_call(
        kernel,
        grid=(b_tot,),
        in_specs=[
            pl.BlockSpec((nq, c), lambda i: (i, 0)),        # q window (pipelined)
            pl.BlockSpec((nh, nq, nk), lambda i: (0, 0, 0)),  # rpb (VMEM-resident)
            pl.BlockSpec((c, c), lambda i: (0, 0)),         # w_proj
            pl.BlockSpec((1, c), lambda i: (0, 0)),         # b_proj
            pl.BlockSpec(memory_space=pl.ANY),              # padded K (HBM)
            pl.BlockSpec(memory_space=pl.ANY),              # padded V (HBM)
        ],
        out_specs=pl.BlockSpec((nq, c), lambda i: (i, 0)),
        out_shape=jax.ShapeDtypeStruct((b_tot * nq, c), jnp.bfloat16),
        scratch_shapes=[
            pltpu.VMEM((2, nk, c), kpad.dtype),   # double-buffered K slab
            pltpu.VMEM((2, nk, c), vpad.dtype),   # double-buffered V slab
            pltpu.SemaphoreType.DMA((2, 2)),
        ],
        compiler_params=pltpu.CompilerParams(
            dimension_semantics=("arbitrary",),   # cross-step prefetch chain
            vmem_limit_bytes=_VMEM_LIMIT),
    )(q_win, rpb, w_proj, b_proj, kpad, vpad)


def pallas_ln_mlp_residual(xw, shortcut, gamma, beta, w1, b1, w2, b2, eps=1e-5):
    M, C = xw.shape
    H = w1.shape[1]
    tm = _row_tile(M)
    return pl.pallas_call(
        partial(_ln_mlp_residual_kernel, eps=eps),
        grid=(M // tm,),
        in_specs=[
            pl.BlockSpec((tm, C), lambda i: (i, 0)),
            pl.BlockSpec((tm, C), lambda i: (i, 0)),
            pl.BlockSpec((1, C), lambda i: (0, 0)),
            pl.BlockSpec((1, C), lambda i: (0, 0)),
            pl.BlockSpec((C, H), lambda i: (0, 0)),
            pl.BlockSpec((1, H), lambda i: (0, 0)),
            pl.BlockSpec((H, C), lambda i: (0, 0)),
            pl.BlockSpec((1, C), lambda i: (0, 0)),
        ],
        out_specs=pl.BlockSpec((tm, C), lambda i: (i, 0)),
        out_shape=jax.ShapeDtypeStruct((M, C), jnp.float32),
        compiler_params=pltpu.CompilerParams(
            dimension_semantics=("parallel",), vmem_limit_bytes=_VMEM_LIMIT),
    )(xw, shortcut, gamma.reshape(1, C), beta.reshape(1, C),
      w1, b1.reshape(1, H), w2, b2.reshape(1, C))


# ----------------------------------------------------------------------------
# JAX glue (window partition / reverse, rpi) -- cheap layout plumbing
# ----------------------------------------------------------------------------
def window_partition(x, ws):
    b, h, w, c = x.shape
    x = x.reshape(b, h // ws, ws, w // ws, ws, c)
    return x.transpose(0, 1, 3, 2, 4, 5).reshape(-1, ws, ws, c)


def window_reverse(windows, ws, h, w):
    c = windows.shape[-1]
    b = windows.shape[0] // ((h // ws) * (w // ws))
    x = windows.reshape(b, h // ws, w // ws, ws, ws, c)
    return x.transpose(0, 1, 3, 2, 4, 5).reshape(b, h, w, c)


def unfold_overlap(t, ws, ows):
    # Reference-only emulation of nn.Unfold(kernel=(ows,ows), stride=ws,
    # padding=(ows-ws)//2) on an NHWC tensor -> (b*nw, ows*ows, c).
    b, h, w, c = t.shape
    p = (ows - ws) // 2
    tp = jnp.pad(t, ((0, 0), (p, p), (p, p), (0, 0)))
    nwh, nww = h // ws, w // ws
    row = jnp.arange(nwh)[:, None] * ws + jnp.arange(ows)[None, :]
    col = jnp.arange(nww)[:, None] * ws + jnp.arange(ows)[None, :]
    win = tp[:, row]
    win = win[:, :, :, col]
    win = win.transpose(0, 1, 3, 2, 4, 5)
    return win.reshape(b * nwh * nww, ows * ows, c)


def calculate_rpi_oca(ws, ows):
    coords_ori = jnp.stack(
        jnp.meshgrid(jnp.arange(ws), jnp.arange(ws), indexing="ij")).reshape(2, -1)
    coords_ext = jnp.stack(
        jnp.meshgrid(jnp.arange(ows), jnp.arange(ows), indexing="ij")).reshape(2, -1)
    rel = coords_ext[:, None, :] - coords_ori[:, :, None]
    rel = rel.transpose(1, 2, 0) + (ws - ows + 1)
    return rel[..., 0] * (ws + ows - 1) + rel[..., 1]


# ----------------------------------------------------------------------------
# OCAB forward (Pallas-backed)
# ----------------------------------------------------------------------------
def ocab_forward(params, x, x_size, rpi, *, window_size, overlap_win_size, num_heads):
    h, w = x_size
    b, L, c = x.shape
    ws, ows, nh = window_size, overlap_win_size, num_heads
    d = c // nh
    p = (ows - ws) // 2
    scale = d ** (-0.5)
    M = b * L
    bf16 = jnp.bfloat16

    x2d = x.reshape(M, c)

    # Pre-cast weights once; fold the q-scale into W_q / b_q (exact, linearity).
    w_qkv, b_qkv = params["w_qkv"], params["b_qkv"]
    w_q = (w_qkv[:, :c] * scale).astype(bf16)
    w_k = w_qkv[:, c:2 * c].astype(bf16)
    w_v = w_qkv[:, 2 * c:].astype(bf16)
    b_q = (b_qkv[:c] * scale).reshape(1, c)
    b_k = b_qkv[c:2 * c].reshape(1, c)
    b_v = b_qkv[2 * c:].reshape(1, c)

    # 1) LN1 + QKV projection (fused, row-tiled, three bf16 outputs).
    q2d, k2d, v2d = pallas_ln_qkv(x2d, params["g1"], params["beta1"],
                                  w_q, b_q, w_k, b_k, w_v, b_v)

    # Spatial zero-pad of K/V (matches nn.Unfold's implicit padding); the
    # overlapping windows themselves are gathered in-kernel via DMA.
    kpad = jnp.pad(k2d.reshape(b, h, w, c), ((0, 0), (p, p), (p, p), (0, 0)))
    vpad = jnp.pad(v2d.reshape(b, h, w, c), ((0, 0), (p, p), (p, p), (0, 0)))

    nq, nk = ws * ws, ows * ows
    nwh, nww = h // ws, w // ws

    # Query windows: one bf16 copy, already lane-dense (rows, C).
    q_win = window_partition(q2d.reshape(b, h, w, c), ws).reshape(-1, c)

    # Relative-position bias as (nh, nq, nk) f32.
    rpb = params["rpb_table"][rpi.reshape(-1)].reshape(nq, nk, nh).transpose(2, 0, 1)

    # 2) Overlapping window attention + fused output projection.
    attn_proj = pallas_window_attention_proj(
        q_win, kpad, vpad, rpb,
        params["w_proj"].astype(bf16), params["b_proj"].reshape(1, c),
        ws=ws, ows=ows, nh=nh, nwh=nwh, nww=nww)                 # (b_*nq, c) bf16

    xw = window_reverse(attn_proj.reshape(-1, ws, ws, c), ws, h, w).reshape(M, c)

    # 3) residual + LN2 + MLP(GELU) + residual (fused).
    out = pallas_ln_mlp_residual(xw, x2d, params["g2"], params["beta2"],
                                 params["w_fc1"].astype(bf16), params["b_fc1"],
                                 params["w_fc2"].astype(bf16), params["b_fc2"])
    return out.reshape(b, L, c)


# ----------------------------------------------------------------------------
# Pure-JAX f32 reference (mirrors the PyTorch forward) for verification
# ----------------------------------------------------------------------------
def ref_forward(params, x, x_size, rpi, *, window_size, overlap_win_size, num_heads):
    h, w = x_size
    b, L, c = x.shape
    ws, ows, nh = window_size, overlap_win_size, num_heads
    d = c // nh
    scale = d ** (-0.5)

    def ln(y, g, be):
        mu = jnp.mean(y, -1, keepdims=True)
        var = jnp.mean((y - mu) ** 2, -1, keepdims=True)
        return (y - mu) / jnp.sqrt(var + 1e-5) * g + be

    shortcut = x
    xn = ln(x, params["g1"], params["beta1"])
    qkv = xn @ params["w_qkv"] + params["b_qkv"]
    qkv = qkv.reshape(b, h, w, 3, c)
    q = qkv[..., 0, :]
    kv = jnp.concatenate([qkv[..., 1, :], qkv[..., 2, :]], axis=-1)

    qw = window_partition(q, ws).reshape(-1, ws * ws, c)
    kvw = unfold_overlap(kv, ws, ows)
    kw, vw = kvw[..., :c], kvw[..., c:]
    b_ = qw.shape[0]
    nq, n = ws * ws, ows * ows
    qh = qw.reshape(b_, nq, nh, d).transpose(0, 2, 1, 3) * scale
    kh = kw.reshape(b_, n, nh, d).transpose(0, 2, 1, 3)
    vh = vw.reshape(b_, n, nh, d).transpose(0, 2, 1, 3)

    attn = jnp.einsum("bhqd,bhkd->bhqk", qh, kh)
    rpb = params["rpb_table"][rpi.reshape(-1)].reshape(nq, n, nh).transpose(2, 0, 1)
    attn = jax.nn.softmax(attn + rpb[None], axis=-1)
    out = jnp.einsum("bhqk,bhkd->bhqd", attn, vh)
    out = out.transpose(0, 2, 1, 3).reshape(b_, nq, c).reshape(-1, ws, ws, c)
    xw = window_reverse(out, ws, h, w).reshape(b, h * w, c)

    x1 = xw @ params["w_proj"] + params["b_proj"] + shortcut
    xn2 = ln(x1, params["g2"], params["beta2"])
    hmid = xn2 @ params["w_fc1"] + params["b_fc1"]
    hmid = 0.5 * hmid * (1.0 + jax.lax.erf(hmid / jnp.sqrt(2.0)))
    return x1 + hmid @ params["w_fc2"] + params["b_fc2"]


# ----------------------------------------------------------------------------
if __name__ == "__main__":
    # Small OCAB config: dim=32, 2 heads, 8x8 resolution, window 4,
    # overlap_ratio 0.5 -> overlapping window 6, mlp_ratio 2.
    dim, num_heads = 32, 2
    ws, overlap_ratio = 4, 0.5
    ows = int(ws * overlap_ratio) + ws            # 6
    h = w = 8
    b = 2
    mlp_hidden = int(dim * 2)

    key = jax.random.PRNGKey(0)
    ks = jax.random.split(key, 16)

    def rnd(k, shape, s):
        return jax.random.normal(k, shape, jnp.float32) * s

    params = dict(
        g1=1.0 + rnd(ks[0], (dim,), 0.05),
        beta1=rnd(ks[1], (dim,), 0.05),
        w_qkv=rnd(ks[2], (dim, 3 * dim), 0.1),
        b_qkv=rnd(ks[3], (3 * dim,), 0.02),
        rpb_table=rnd(ks[4], ((ws + ows - 1) ** 2, num_heads), 0.02),
        w_proj=rnd(ks[5], (dim, dim), 0.1),
        b_proj=rnd(ks[6], (dim,), 0.02),
        g2=1.0 + rnd(ks[7], (dim,), 0.05),
        beta2=rnd(ks[8], (dim,), 0.05),
        w_fc1=rnd(ks[9], (dim, mlp_hidden), 0.1),
        b_fc1=rnd(ks[10], (mlp_hidden,), 0.02),
        w_fc2=rnd(ks[11], (mlp_hidden, dim), 0.1),
        b_fc2=rnd(ks[12], (dim,), 0.02),
    )

    x = jax.random.normal(jax.random.PRNGKey(1), (b, h * w, dim), jnp.float32)
    rpi = calculate_rpi_oca(ws, ows)              # (ws*ws, ows*ows) int32

    out = ocab_forward(params, x, (h, w), rpi,
                       window_size=ws, overlap_win_size=ows, num_heads=num_heads)
    out = jax.block_until_ready(out)

    ref = ref_forward(params, x, (h, w), rpi,
                      window_size=ws, overlap_win_size=ows, num_heads=num_heads)

    assert out.shape == (b, h * w, dim)
    max_err = float(jnp.max(jnp.abs(out - ref)))
    # Tolerance covers bf16 matmul operands, the approximate EUP reciprocal in
    # the softmax and the tanh-GELU form.
    assert max_err < 8e-2, f"mismatch vs reference, max abs err {max_err}"
    print("KERNEL_OK")
</pallas_src>

<mosaic_0001>
module attributes {stable_mosaic.version = 11 : i64} {
  func.func @_ln_qkv_kernel(%arg0: i32, %arg1: memref<64x32xf32, #tpu.memory_space<vmem>>, %arg2: memref<1x32xf32, #tpu.memory_space<vmem>>, %arg3: memref<1x32xf32, #tpu.memory_space<vmem>>, %arg4: memref<32x32xbf16, #tpu.memory_space<vmem>>, %arg5: memref<1x32xf32, #tpu.memory_space<vmem>>, %arg6: memref<32x32xbf16, #tpu.memory_space<vmem>>, %arg7: memref<1x32xf32, #tpu.memory_space<vmem>>, %arg8: memref<32x32xbf16, #tpu.memory_space<vmem>>, %arg9: memref<1x32xf32, #tpu.memory_space<vmem>>, %arg10: memref<64x32xbf16, #tpu.memory_space<vmem>>, %arg11: memref<64x32xbf16, #tpu.memory_space<vmem>>, %arg12: memref<64x32xbf16, #tpu.memory_space<vmem>>) attributes {dimension_semantics = [#tpu.dimension_semantics<parallel>], iteration_bounds = array<i64: 2>, scalar_prefetch = 0 : i64, scratch_operands = 0 : i64, tpu.core_type = #tpu.core_type<tc>, window_params = [{transform_indices = @transform_0, window_bounds = array<i64: 64, 32>}, {pipeline_mode = #tpu.pipeline_mode<synchronous>, transform_indices = @transform_1, window_bounds = array<i64: 1, 32>}, {pipeline_mode = #tpu.pipeline_mode<synchronous>, transform_indices = @transform_2, window_bounds = array<i64: 1, 32>}, {pipeline_mode = #tpu.pipeline_mode<synchronous>, transform_indices = @transform_3, window_bounds = array<i64: 32, 32>}, {pipeline_mode = #tpu.pipeline_mode<synchronous>, transform_indices = @transform_4, window_bounds = array<i64: 1, 32>}, {pipeline_mode = #tpu.pipeline_mode<synchronous>, transform_indices = @transform_5, window_bounds = array<i64: 32, 32>}, {pipeline_mode = #tpu.pipeline_mode<synchronous>, transform_indices = @transform_6, window_bounds = array<i64: 1, 32>}, {pipeline_mode = #tpu.pipeline_mode<synchronous>, transform_indices = @transform_7, window_bounds = array<i64: 32, 32>}, {pipeline_mode = #tpu.pipeline_mode<synchronous>, transform_indices = @transform_8, window_bounds = array<i64: 1, 32>}, {transform_indices = @transform_9, window_bounds = array<i64: 64, 32>}, {transform_indices = @transform_10, window_bounds = array<i64: 64, 32>}, {transform_indices = @transform_11, window_bounds = array<i64: 64, 32>}]} {
    %c0 = arith.constant 0 : index
    %c0_0 = arith.constant 0 : index
    %0 = vector.load %arg1[%c0, %c0_0] : memref<64x32xf32, #tpu.memory_space<vmem>>, vector<64x32xf32>
    %cst = arith.constant dense<0.000000e+00> : vector<64xf32>
    %1 = vector.multi_reduction <add>, %0, %cst [1] : vector<64x32xf32> to vector<64xf32>
    %2 = vector.shape_cast %1 : vector<64xf32> to vector<64x1xf32>
    %cst_1 = arith.constant 3.200000e+01 : f32
    %3 = vector.broadcast %cst_1 : f32 to vector<64x1xf32>
    %4 = arith.divf %2, %3 : vector<64x1xf32>
    %5 = vector.broadcast %4 : vector<64x1xf32> to vector<64x32xf32>
    %6 = arith.subf %0, %5 : vector<64x32xf32>
    %7 = arith.mulf %6, %6 : vector<64x32xf32>
    %cst_2 = arith.constant dense<0.000000e+00> : vector<64xf32>
    %8 = vector.multi_reduction <add>, %7, %cst_2 [1] : vector<64x32xf32> to vector<64xf32>
    %9 = vector.shape_cast %8 : vector<64xf32> to vector<64x1xf32>
    %cst_3 = arith.constant 3.200000e+01 : f32
    %10 = vector.broadcast %cst_3 : f32 to vector<64x1xf32>
    %11 = arith.divf %9, %10 : vector<64x1xf32>
    %12 = vector.broadcast %4 : vector<64x1xf32> to vector<64x32xf32>
    %13 = arith.subf %0, %12 : vector<64x32xf32>
    %cst_4 = arith.constant 9.99999974E-6 : f32
    %14 = vector.broadcast %cst_4 : f32 to vector<64x1xf32>
    %15 = arith.addf %11, %14 : vector<64x1xf32>
    %16 = math.rsqrt %15 : vector<64x1xf32>
    %17 = vector.broadcast %16 : vector<64x1xf32> to vector<64x32xf32>
    %18 = arith.mulf %13, %17 : vector<64x32xf32>
    %c0_5 = arith.constant 0 : index
    %c0_6 = arith.constant 0 : index
    %19 = vector.load %arg2[%c0_5, %c0_6] : memref<1x32xf32, #tpu.memory_space<vmem>>, vector<1x32xf32>
    %20 = vector.broadcast %19 : vector<1x32xf32> to vector<64x32xf32>
    %21 = arith.mulf %18, %20 : vector<64x32xf32>
    %c0_7 = arith.constant 0 : index
    %c0_8 = arith.constant 0 : index
    %22 = vector.load %arg3[%c0_7, %c0_8] : memref<1x32xf32, #tpu.memory_space<vmem>>, vector<1x32xf32>
    %23 = vector.broadcast %22 : vector<1x32xf32> to vector<64x32xf32>
    %24 = arith.addf %21, %23 : vector<64x32xf32>
    %25 = arith.truncf %24 : vector<64x32xf32> to vector<64x32xbf16>
    %c0_9 = arith.constant 0 : index
    %c0_10 = arith.constant 0 : index
    %26 = vector.load %arg4[%c0_9, %c0_10] : memref<32x32xbf16, #tpu.memory_space<vmem>>, vector<32x32xbf16>
    %cst_11 = arith.constant dense<0.000000e+00> : vector<64x32xf32>
    %27 = tpu.matmul %25, %26, %cst_11 {dimension_numbers = #tpu.dot_dimension_numbers<[1], [0], [0], [1], [0, 0, 1, 1], [], []>} : vector<64x32xbf16>, vector<32x32xbf16>, vector<64x32xf32> -> vector<64x32xf32>
    %c0_12 = arith.constant 0 : index
    %c0_13 = arith.constant 0 : index
    %28 = vector.load %arg5[%c0_12, %c0_13] : memref<1x32xf32, #tpu.memory_space<vmem>>, vector<1x32xf32>
    %29 = vector.broadcast %28 : vector<1x32xf32> to vector<64x32xf32>
    %30 = arith.addf %27, %29 : vector<64x32xf32>
    %31 = arith.truncf %30 : vector<64x32xf32> to vector<64x32xbf16>
    %c0_14 = arith.constant 0 : index
    %c0_15 = arith.constant 0 : index
    %32 = vector.load %arg10[%c0_14, %c0_15] : memref<64x32xbf16, #tpu.memory_space<vmem>>, vector<64x32xbf16>
    tpu.vector_store %arg10[%c0_14, %c0_15], %31 {strides = array<i32>} : memref<64x32xbf16, #tpu.memory_space<vmem>>, vector<64x32xbf16>,
    %c0_16 = arith.constant 0 : index
    %c0_17 = arith.constant 0 : index
    %33 = vector.load %arg6[%c0_16, %c0_17] : memref<32x32xbf16, #tpu.memory_space<vmem>>, vector<32x32xbf16>
    %cst_18 = arith.constant dense<0.000000e+00> : vector<64x32xf32>
    %34 = tpu.matmul %25, %33, %cst_18 {dimension_numbers = #tpu.dot_dimension_numbers<[1], [0], [0], [1], [0, 0, 1, 1], [], []>} : vector<64x32xbf16>, vector<32x32xbf16>, vector<64x32xf32> -> vector<64x32xf32>
    %c0_19 = arith.constant 0 : index
    %c0_20 = arith.constant 0 : index
    %35 = vector.load %arg7[%c0_19, %c0_20] : memref<1x32xf32, #tpu.memory_space<vmem>>, vector<1x32xf32>
    %36 = vector.broadcast %35 : vector<1x32xf32> to vector<64x32xf32>
    %37 = arith.addf %34, %36 : vector<64x32xf32>
    %38 = arith.truncf %37 : vector<64x32xf32> to vector<64x32xbf16>
    %c0_21 = arith.constant 0 : index
    %c0_22 = arith.constant 0 : index
    %39 = vector.load %arg11[%c0_21, %c0_22] : memref<64x32xbf16, #tpu.memory_space<vmem>>, vector<64x32xbf16>
    tpu.vector_store %arg11[%c0_21, %c0_22], %38 {strides = array<i32>} : memref<64x32xbf16, #tpu.memory_space<vmem>>, vector<64x32xbf16>,
    %c0_23 = arith.constant 0 : index
    %c0_24 = arith.constant 0 : index
    %40 = vector.load %arg8[%c0_23, %c0_24] : memref<32x32xbf16, #tpu.memory_space<vmem>>, vector<32x32xbf16>
    %cst_25 = arith.constant dense<0.000000e+00> : vector<64x32xf32>
    %41 = tpu.matmul %25, %40, %cst_25 {dimension_numbers = #tpu.dot_dimension_numbers<[1], [0], [0], [1], [0, 0, 1, 1], [], []>} : vector<64x32xbf16>, vector<32x32xbf16>, vector<64x32xf32> -> vector<64x32xf32>
    %c0_26 = arith.constant 0 : index
    %c0_27 = arith.constant 0 : index
    %42 = vector.load %arg9[%c0_26, %c0_27] : memref<1x32xf32, #tpu.memory_space<vmem>>, vector<1x32xf32>
    %43 = vector.broadcast %42 : vector<1x32xf32> to vector<64x32xf32>
    %44 = arith.addf %41, %43 : vector<64x32xf32>
    %45 = arith.truncf %44 : vector<64x32xf32> to vector<64x32xbf16>
    %c0_28 = arith.constant 0 : index
    %c0_29 = arith.constant 0 : index
    %46 = vector.load %arg12[%c0_28, %c0_29] : memref<64x32xbf16, #tpu.memory_space<vmem>>, vector<64x32xbf16>
    tpu.vector_store %arg12[%c0_28, %c0_29], %45 {strides = array<i32>} : memref<64x32xbf16, #tpu.memory_space<vmem>>, vector<64x32xbf16>,
    return
  }
  func.func @transform_0(%arg0: i32) -> (i32, i32) {
    %c0_i32 = arith.constant 0 : i32
    %c0_i32_0 = arith.constant 0 : i32
    return %arg0, %c0_i32 : i32, i32
  }
  func.func @transform_1(%arg0: i32) -> (i32, i32) {
    %c0_i32 = arith.constant 0 : i32
    %c0_i32_0 = arith.constant 0 : i32
    %c0_i32_1 = arith.constant 0 : i32
    return %c0_i32, %c0_i32_0 : i32, i32
  }
  func.func @transform_2(%arg0: i32) -> (i32, i32) {
    %c0_i32 = arith.constant 0 : i32
    %c0_i32_0 = arith.constant 0 : i32
    %c0_i32_1 = arith.constant 0 : i32
    return %c0_i32, %c0_i32_0 : i32, i32
  }
  func.func @transform_3(%arg0: i32) -> (i32, i32) {
    %c0_i32 = arith.constant 0 : i32
    %c0_i32_0 = arith.constant 0 : i32
    %c0_i32_1 = arith.constant 0 : i32
    return %c0_i32, %c0_i32_0 : i32, i32
  }
  func.func @transform_4(%arg0: i32) -> (i32, i32) {
    %c0_i32 = arith.constant 0 : i32
    %c0_i32_0 = arith.constant 0 : i32
    %c0_i32_1 = arith.constant 0 : i32
    return %c0_i32, %c0_i32_0 : i32, i32
  }
  func.func @transform_5(%arg0: i32) -> (i32, i32) {
    %c0_i32 = arith.constant 0 : i32
    %c0_i32_0 = arith.constant 0 : i32
    %c0_i32_1 = arith.constant 0 : i32
    return %c0_i32, %c0_i32_0 : i32, i32
  }
  func.func @transform_6(%arg0: i32) -> (i32, i32) {
    %c0_i32 = arith.constant 0 : i32
    %c0_i32_0 = arith.constant 0 : i32
    %c0_i32_1 = arith.constant 0 : i32
    return %c0_i32, %c0_i32_0 : i32, i32
  }
  func.func @transform_7(%arg0: i32) -> (i32, i32) {
    %c0_i32 = arith.constant 0 : i32
    %c0_i32_0 = arith.constant 0 : i32
    %c0_i32_1 = arith.constant 0 : i32
    return %c0_i32, %c0_i32_0 : i32, i32
  }
  func.func @transform_8(%arg0: i32) -> (i32, i32) {
    %c0_i32 = arith.constant 0 : i32
    %c0_i32_0 = arith.constant 0 : i32
    %c0_i32_1 = arith.constant 0 : i32
    return %c0_i32, %c0_i32_0 : i32, i32
  }
  func.func @transform_9(%arg0: i32) -> (i32, i32) {
    %c0_i32 = arith.constant 0 : i32
    %c0_i32_0 = arith.constant 0 : i32
    return %arg0, %c0_i32 : i32, i32
  }
  func.func @transform_10(%arg0: i32) -> (i32, i32) {
    %c0_i32 = arith.constant 0 : i32
    %c0_i32_0 = arith.constant 0 : i32
    return %arg0, %c0_i32 : i32, i32
  }
  func.func @transform_11(%arg0: i32) -> (i32, i32) {
    %c0_i32 = arith.constant 0 : i32
    %c0_i32_0 = arith.constant 0 : i32
    return %arg0, %c0_i32 : i32, i32
  }
}

</mosaic_0001>

<llo_original>
// kernel: tpu_custom_call.1
$region0: #{tpu_custom_call.1}
  #allocation0 [shape = 'u32[]', space=smem, size = 0x4, offset = 0x4, fixed_abs, tag = 'smem constant byte address 0x4 - core index']
  #allocation1 [shape = 'u32[144,128]{1,0:T(1,128)}', space=vmem, size = 0x12000, scoped, tag = 'internal scratch']
  %s0 = inlined_call_operand.vmem [shape: f32[128,32], index: 0, kind: input, shape index: {}]
  %s1 = inlined_call_operand.vmem [shape: f32[1,32], index: 1, kind: input, shape index: {}]
  %s2 = inlined_call_operand.vmem [shape: f32[1,32], index: 2, kind: input, shape index: {}]
  %s3 = inlined_call_operand.vmem [shape: bf16[32,32], index: 3, kind: input, shape index: {}]
  %s4 = inlined_call_operand.vmem [shape: f32[1,32], index: 4, kind: input, shape index: {}]
  %s5 = inlined_call_operand.vmem [shape: bf16[32,32], index: 5, kind: input, shape index: {}]
  %s6 = inlined_call_operand.vmem [shape: f32[1,32], index: 6, kind: input, shape index: {}]
  %s7 = inlined_call_operand.vmem [shape: bf16[32,32], index: 7, kind: input, shape index: {}]
  %s8 = inlined_call_operand.vmem [shape: f32[1,32], index: 8, kind: input, shape index: {}]
  %s9 = inlined_call_operand.vmem [shape: bf16[128,32], index: 9, kind: output, shape index: {0}]
  %s10 = inlined_call_operand.vmem [shape: bf16[128,32], index: 10, kind: output, shape index: {1}]
  %s11 = inlined_call_operand.vmem [shape: bf16[128,32], index: 11, kind: output, shape index: {2}]
  %12 = xla_tuple %s9, %s10, %s11
  %s13 = sld [smem:[#allocation0]]
  $region85: #{tpu_custom_call.1} parent=0
    _
  %s15 = ssub.s32 1, %s13
  %s16 = scalar_select 0, %s15, %s13
  loop: start=0, step=1, limit=4
  $region2: #{tpu_custom_call.1} parent=0 // loop_pre_header
    _
  $region3: #{tpu_custom_call.1} parent=0 // loop_header
    %s18 = sphi 0, %s22
    %p19 = scmp.ge.s32.totalorder %s18, 4
    %s28 = sphi 0, %s30
    %s31 = sphi 0, %s28
    %s32 = sphi 0, %s31
    %s48 = sphi 0, %s32
    %s52 = sphi 0, %s52
    %s54 = sphi 0, %s52
    %s55 = sphi 0, %s54
    %s69 = sphi 0, %s55
    %s73 = sphi 0, %s73
    %s75 = sphi 0, %s73
    %s76 = sphi 0, %s75
    %s90 = sphi 0, %s76
    %s94 = sphi 0, %s94
    %s96 = sphi 0, %s94
    %s97 = sphi 0, %s96
    %s111 = sphi 0, %s97
    %s115 = sphi 0, %s115
    %s117 = sphi 0, %s115
    %s118 = sphi 0, %s117
    %s132 = sphi 0, %s118
    %s136 = sphi 0, %s136
    %s138 = sphi 0, %s136
    %s139 = sphi 0, %s138
    %s153 = sphi 0, %s139
    %s157 = sphi 0, %s157
    %s159 = sphi 0, %s157
    %s160 = sphi 0, %s159
    %s174 = sphi 0, %s160
    %s178 = sphi 0, %s178
    %s180 = sphi 0, %s178
    %s181 = sphi 0, %s180
    %s195 = sphi 0, %s181
    %s199 = sphi 0, %s199
    %s201 = sphi 0, %s199
    %s202 = sphi 0, %s201
    %s216 = sphi 0, %s202
    %s222 = sphi 0, %s224
    %s225 = sphi 0, %s222
    %s226 = sphi 0, %s225
    %s242 = sphi 0, %s226
    %s248 = sphi 0, %s250
    %s251 = sphi 0, %s248
    %s252 = sphi 0, %s251
    %s268 = sphi 0, %s252
    %s274 = sphi 0, %s276
    %s277 = sphi 0, %s274
    %s278 = sphi 0, %s277
    %s294 = sphi 0, %s278
  $region4: #{tpu_custom_call.1} parent=0 // loop_header_branch
    %21 = sbr.rel (%p19) target = $region8
  $region5: #{tpu_custom_call.1} parent=0 // loop_body
    %s23 = ssub.s32 %s18, 1
    %s24 = ssub.s32 %s18, 2
    %s25 = sadd.s32 %s18, 1
    %s26 = ssub.s32 %s18, %s25
    %p27 = scmp.eq.s32.totalorder %s26, 0
    %s29 = sadd.s32 %s28, 1
    %s30 = scalar_select %p27, %s28, %s29
    %p33 = pneg %p27
    %p34 = scmp.eq.s32.totalorder %s18, 1
    %p35 = por %p33, %p34
    %p36 = scmp.ne.s32.totalorder %s28, %s31
    %p37 = scmp.eq.s32.totalorder %s18, 0
    %p38 = por %p36, %p37
    %p39 = scmp.ne.s32.totalorder %s28, %s31
    %p40 = scmp.eq.s32.totalorder %s23, 1
    %p41 = por %p39, %p40
    %p42 = scmp.ne.s32.totalorder %s31, %s32
    %p43 = scmp.eq.s32.totalorder %s23, 0
    %p44 = por %p42, %p43
    %p45 = scmp.ne.s32.totalorder %s31, %s32
    %p46 = scmp.eq.s32.totalorder %s24, 1
    %p47 = por %p45, %p46
    %p49 = scmp.ne.s32.totalorder %s32, %s48
    %p50 = scmp.eq.s32.totalorder %s24, 0
    %p51 = por %p49, %p50
    %s53 = sadd.s32 %s52, 1
    %p56 = scmp.eq.s32.totalorder %s18, 1
    %p57 = scmp.ne.s32.totalorder %s52, %s54
    %p58 = scmp.eq.s32.totalorder %s18, 0
    %p59 = por %p57, %p58
    %p60 = scmp.ne.s32.totalorder %s52, %s54
    %p61 = scmp.eq.s32.totalorder %s23, 1
    %p62 = por %p60, %p61
    %p63 = scmp.ne.s32.totalorder %s54, %s55
    %p64 = scmp.eq.s32.totalorder %s23, 0
    %p65 = por %p63, %p64
    %p66 = scmp.ne.s32.totalorder %s54, %s55
    %p67 = scmp.eq.s32.totalorder %s24, 1
    %p68 = por %p66, %p67
    %p70 = scmp.ne.s32.totalorder %s55, %s69
    %p71 = scmp.eq.s32.totalorder %s24, 0
    %p72 = por %p70, %p71
    %s74 = sadd.s32 %s73, 1
    %p77 = scmp.eq.s32.totalorder %s18, 1
    %p78 = scmp.ne.s32.totalorder %s73, %s75
    %p79 = scmp.eq.s32.totalorder %s18, 0
    %p80 = por %p78, %p79
    %p81 = scmp.ne.s32.totalorder %s73, %s75
    %p82 = scmp.eq.s32.totalorder %s23, 1
    %p83 = por %p81, %p82
    %p84 = scmp.ne.s32.totalorder %s75, %s76
    %p85 = scmp.eq.s32.totalorder %s23, 0
    %p86 = por %p84, %p85
    %p87 = scmp.ne.s32.totalorder %s75, %s76
    %p88 = scmp.eq.s32.totalorder %s24, 1
    %p89 = por %p87, %p88
    %p91 = scmp.ne.s32.totalorder %s76, %s90
    %p92 = scmp.eq.s32.totalorder %s24, 0
    %p93 = por %p91, %p92
    %s95 = sadd.s32 %s94, 1
    %p98 = scmp.eq.s32.totalorder %s18, 1
    %p99 = scmp.ne.s32.totalorder %s94, %s96
    %p100 = scmp.eq.s32.totalorder %s18, 0
    %p101 = por %p99, %p100
    %p102 = scmp.ne.s32.totalorder %s94, %s96
    %p103 = scmp.eq.s32.totalorder %s23, 1
    %p104 = por %p102, %p103
    %p105 = scmp.ne.s32.totalorder %s96, %s97
    %p106 = scmp.eq.s32.totalorder %s23, 0
    %p107 = por %p105, %p106
    %p108 = scmp.ne.s32.totalorder %s96, %s97
    %p109 = scmp.eq.s32.totalorder %s24, 1
    %p110 = por %p108, %p109
    %p112 = scmp.ne.s32.totalorder %s97, %s111
    %p113 = scmp.eq.s32.totalorder %s24, 0
    %p114 = por %p112, %p113
    %s116 = sadd.s32 %s115, 1
    %p119 = scmp.eq.s32.totalorder %s18, 1
    %p120 = scmp.ne.s32.totalorder %s115, %s117
    %p121 = scmp.eq.s32.totalorder %s18, 0
    %p122 = por %p120, %p121
    %p123 = scmp.ne.s32.totalorder %s115, %s117
    %p124 = scmp.eq.s32.totalorder %s23, 1
    %p125 = por %p123, %p124
    %p126 = scmp.ne.s32.totalorder %s117, %s118
    %p127 = scmp.eq.s32.totalorder %s23, 0
    %p128 = por %p126, %p127
    %p129 = scmp.ne.s32.totalorder %s117, %s118
    %p130 = scmp.eq.s32.totalorder %s24, 1
    %p131 = por %p129, %p130
    %p133 = scmp.ne.s32.totalorder %s118, %s132
    %p134 = scmp.eq.s32.totalorder %s24, 0
    %p135 = por %p133, %p134
    %s137 = sadd.s32 %s136, 1
    %p140 = scmp.eq.s32.totalorder %s18, 1
    %p141 = scmp.ne.s32.totalorder %s136, %s138
    %p142 = scmp.eq.s32.totalorder %s18, 0
    %p143 = por %p141, %p142
    %p144 = scmp.ne.s32.totalorder %s136, %s138
    %p145 = scmp.eq.s32.totalorder %s23, 1
    %p146 = por %p144, %p145
    %p147 = scmp.ne.s32.totalorder %s138, %s139
    %p148 = scmp.eq.s32.totalorder %s23, 0
    %p149 = por %p147, %p148
    %p150 = scmp.ne.s32.totalorder %s138, %s139
    %p151 = scmp.eq.s32.totalorder %s24, 1
    %p152 = por %p150, %p151
    %p154 = scmp.ne.s32.totalorder %s139, %s153
    %p155 = scmp.eq.s32.totalorder %s24, 0
    %p156 = por %p154, %p155
    %s158 = sadd.s32 %s157, 1
    %p161 = scmp.eq.s32.totalorder %s18, 1
    %p162 = scmp.ne.s32.totalorder %s157, %s159
    %p163 = scmp.eq.s32.totalorder %s18, 0
    %p164 = por %p162, %p163
    %p165 = scmp.ne.s32.totalorder %s157, %s159
    %p166 = scmp.eq.s32.totalorder %s23, 1
    %p167 = por %p165, %p166
    %p168 = scmp.ne.s32.totalorder %s159, %s160
    %p169 = scmp.eq.s32.totalorder %s23, 0
    %p170 = por %p168, %p169
    %p171 = scmp.ne.s32.totalorder %s159, %s160
    %p172 = scmp.eq.s32.totalorder %s24, 1
    %p173 = por %p171, %p172
    %p175 = scmp.ne.s32.totalorder %s160, %s174
    %p176 = scmp.eq.s32.totalorder %s24, 0
    %p177 = por %p175, %p176
    %s179 = sadd.s32 %s178, 1
    %p182 = scmp.eq.s32.totalorder %s18, 1
    %p183 = scmp.ne.s32.totalorder %s178, %s180
    %p184 = scmp.eq.s32.totalorder %s18, 0
    %p185 = por %p183, %p184
    %p186 = scmp.ne.s32.totalorder %s178, %s180
    %p187 = scmp.eq.s32.totalorder %s23, 1
    %p188 = por %p186, %p187
    %p189 = scmp.ne.s32.totalorder %s180, %s181
    %p190 = scmp.eq.s32.totalorder %s23, 0
    %p191 = por %p189, %p190
    %p192 = scmp.ne.s32.totalorder %s180, %s181
    %p193 = scmp.eq.s32.totalorder %s24, 1
    %p194 = por %p192, %p193
    %p196 = scmp.ne.s32.totalorder %s181, %s195
    %p197 = scmp.eq.s32.totalorder %s24, 0
    %p198 = por %p196, %p197
    %s200 = sadd.s32 %s199, 1
    %p203 = scmp.eq.s32.totalorder %s18, 1
    %p204 = scmp.ne.s32.totalorder %s199, %s201
    %p205 = scmp.eq.s32.totalorder %s18, 0
    %p206 = por %p204, %p205
    %p207 = scmp.ne.s32.totalorder %s199, %s201
    %p208 = scmp.eq.s32.totalorder %s23, 1
    %p209 = por %p207, %p208
    %p210 = scmp.ne.s32.totalorder %s201, %s202
    %p211 = scmp.eq.s32.totalorder %s23, 0
    %p212 = por %p210, %p211
    %p213 = scmp.ne.s32.totalorder %s201, %s202
    %p214 = scmp.eq.s32.totalorder %s24, 1
    %p215 = por %p213, %p214
    %p217 = scmp.ne.s32.totalorder %s202, %s216
    %p218 = scmp.eq.s32.totalorder %s24, 0
    %p219 = por %p217, %p218
    %s220 = ssub.s32 %s18, %s25
    %p221 = scmp.eq.s32.totalorder %s220, 0
    %s223 = sadd.s32 %s222, 1
    %s224 = scalar_select %p221, %s222, %s223
    %p227 = pneg %p221
    %p228 = scmp.eq.s32.totalorder %s18, 1
    %p229 = por %p227, %p228
    %p230 = scmp.ne.s32.totalorder %s222, %s225
    %p231 = scmp.eq.s32.totalorder %s18, 0
    %p232 = por %p230, %p231
    %p233 = scmp.ne.s32.totalorder %s222, %s225
    %p234 = scmp.eq.s32.totalorder %s23, 1
    %p235 = por %p233, %p234
    %p236 = scmp.ne.s32.totalorder %s225, %s226
    %p237 = scmp.eq.s32.totalorder %s23, 0
    %p238 = por %p236, %p237
    %p239 = scmp.ne.s32.totalorder %s225, %s226
    %p240 = scmp.eq.s32.totalorder %s24, 1
    %p241 = por %p239, %p240
    %p243 = scmp.ne.s32.totalorder %s226, %s242
    %p244 = scmp.eq.s32.totalorder %s24, 0
    %p245 = por %p243, %p244
    %s246 = ssub.s32 %s18, %s25
    %p247 = scmp.eq.s32.totalorder %s246, 0
    %s249 = sadd.s32 %s248, 1
    %s250 = scalar_select %p247, %s248, %s249
    %p253 = pneg %p247
    %p254 = scmp.eq.s32.totalorder %s18, 1
    %p255 = por %p253, %p254
    %p256 = scmp.ne.s32.totalorder %s248, %s251
    %p257 = scmp.eq.s32.totalorder %s18, 0
    %p258 = por %p256, %p257
    %p259 = scmp.ne.s32.totalorder %s248, %s251
    %p260 = scmp.eq.s32.totalorder %s23, 1
    %p261 = por %p259, %p260
    %p262 = scmp.ne.s32.totalorder %s251, %s252
    %p263 = scmp.eq.s32.totalorder %s23, 0
    %p264 = por %p262, %p263
    %p265 = scmp.ne.s32.totalorder %s251, %s252
    %p266 = scmp.eq.s32.totalorder %s24, 1
    %p267 = por %p265, %p266
    %p269 = scmp.ne.s32.totalorder %s252, %s268
    %p270 = scmp.eq.s32.totalorder %s24, 0
    %p271 = por %p269, %p270
    %s272 = ssub.s32 %s18, %s25
    %p273 = scmp.eq.s32.totalorder %s272, 0
    %s275 = sadd.s32 %s274, 1
    %s276 = scalar_select %p273, %s274, %s275
    %p279 = pneg %p273
    %p280 = scmp.eq.s32.totalorder %s18, 1
    %p281 = por %p279, %p280
    %p282 = scmp.ne.s32.totalorder %s274, %s277
    %p283 = scmp.eq.s32.totalorder %s18, 0
    %p284 = por %p282, %p283
    %p285 = scmp.ne.s32.totalorder %s274, %s277
    %p286 = scmp.eq.s32.totalorder %s23, 1
    %p287 = por %p285, %p286
    %p288 = scmp.ne.s32.totalorder %s277, %s278
    %p289 = scmp.eq.s32.totalorder %s23, 0
    %p290 = por %p288, %p289
    %p291 = scmp.ne.s32.totalorder %s277, %s278
    %p292 = scmp.eq.s32.totalorder %s24, 1
    %p293 = por %p291, %p292
    %p295 = scmp.ne.s32.totalorder %s278, %s294
    %p296 = scmp.eq.s32.totalorder %s24, 0
    %p297 = por %p295, %p296
    %p298 = scmp.le.s32.totalorder 1, %s18
    %p299 = scmp.lt.s32.totalorder %s18, 3
    %p300 = pnand %p298, %p299
    %p301 = pneg %p300
    // Predicated region
    $region9: #{tpu_custom_call.1} parent=5 // pred_check
      _
    $region10: #{tpu_custom_call.1} parent=5 // pred_check_branch
      %303 = sbr.rel (%p300) target = $region12
    $region11: #{tpu_custom_call.1} parent=5 // pred_region
      %s304 = ssub.s32 %s18, 1
      // Predicated region
      $region13: #{tpu_custom_call.1} parent=11 // pred_check
        %p305 = pneg %p65
      $region14: #{tpu_custom_call.1} parent=11 // pred_check_branch
        %307 = sbr.rel (%p305) target = $region16
      $region15: #{tpu_custom_call.1} parent=11 // pred_region
        _
      $region16: #{tpu_custom_call.1} parent=11 // pred_fallthru
        _
      // Predicated region
      $region17: #{tpu_custom_call.1} parent=11 // pred_check
        %p308 = pneg %p86
      $region18: #{tpu_custom_call.1} parent=11 // pred_check_branch
        %310 = sbr.rel (%p308) target = $region20
      $region19: #{tpu_custom_call.1} parent=11 // pred_region
        _
      $region20: #{tpu_custom_call.1} parent=11 // pred_fallthru
        _
      // Predicated region
      $region21: #{tpu_custom_call.1} parent=11 // pred_check
        %p311 = pneg %p107
      $region22: #{tpu_custom_call.1} parent=11 // pred_check_branch
        %313 = sbr.rel (%p311) target = $region24
      $region23: #{tpu_custom_call.1} parent=11 // pred_region
        _
      $region24: #{tpu_custom_call.1} parent=11 // pred_fallthru
        _
      // Predicated region
      $region25: #{tpu_custom_call.1} parent=11 // pred_check
        %p314 = pneg %p128
      $region26: #{tpu_custom_call.1} parent=11 // pred_check_branch
        %316 = sbr.rel (%p314) target = $region28
      $region27: #{tpu_custom_call.1} parent=11 // pred_region
        _
      $region28: #{tpu_custom_call.1} parent=11 // pred_fallthru
        _
      // Predicated region
      $region29: #{tpu_custom_call.1} parent=11 // pred_check
        %p317 = pneg %p149
      $region30: #{tpu_custom_call.1} parent=11 // pred_check_branch
        %319 = sbr.rel (%p317) target = $region32
      $region31: #{tpu_custom_call.1} parent=11 // pred_region
        _
      $region32: #{tpu_custom_call.1} parent=11 // pred_fallthru
        _
      // Predicated region
      $region33: #{tpu_custom_call.1} parent=11 // pred_check
        %p320 = pneg %p170
      $region34: #{tpu_custom_call.1} parent=11 // pred_check_branch
        %322 = sbr.rel (%p320) target = $region36
      $region35: #{tpu_custom_call.1} parent=11 // pred_region
        _
      $region36: #{tpu_custom_call.1} parent=11 // pred_fallthru
        _
      // Predicated region
      $region37: #{tpu_custom_call.1} parent=11 // pred_check
        %p323 = pneg %p191
      $region38: #{tpu_custom_call.1} parent=11 // pred_check_branch
        %325 = sbr.rel (%p323) target = $region40
      $region39: #{tpu_custom_call.1} parent=11 // pred_region
        _
      $region40: #{tpu_custom_call.1} parent=11 // pred_fallthru
        _
      // Predicated region
      $region41: #{tpu_custom_call.1} parent=11 // pred_check
        %p326 = pneg %p212
      $region42: #{tpu_custom_call.1} parent=11 // pred_check_branch
        %328 = sbr.rel (%p326) target = $region44
      $region43: #{tpu_custom_call.1} parent=11 // pred_region
        _
      $region44: #{tpu_custom_call.1} parent=11 // pred_fallthru
        _
    $region12: #{tpu_custom_call.1} parent=5 // pred_fallthru
      _
    %p329 = scmp.lt.s32.totalorder %s18, 2
    // Predicated region
    $region45: #{tpu_custom_call.1} parent=5 // pred_check
      %p330 = pneg %p329
    $region46: #{tpu_custom_call.1} parent=5 // pred_check_branch
      %332 = sbr.rel (%p330) target = $region48
    $region47: #{tpu_custom_call.1} parent=5 // pred_region
      // Predicated region
      $region49: #{tpu_custom_call.1} parent=47 // pred_check
        %p333 = pneg %p38
      $region50: #{tpu_custom_call.1} parent=47 // pred_check_branch
        %335 = sbr.rel (%p333) target = $region52
      $region51: #{tpu_custom_call.1} parent=47 // pred_region
        %s336 = smul.u32 8, %s18
        %p337 = scmp.lt.s32.totalorder %s336, 15
        %s338 = scalar_select %p337, %s336, 15
        %s339 = smul.addr %s338, 8
        %s340 = scalar_lea.vmem %s0, %s339
        %s341 = smul.u32 8, %s18
      $region52: #{tpu_custom_call.1} parent=47 // pred_fallthru
        _
    $region48: #{tpu_custom_call.1} parent=5 // pred_fallthru
      _
    %p342 = scmp.le.s32.totalorder 1, %s18
    %p343 = scmp.lt.s32.totalorder %s18, 3
    %p344 = pnand %p342, %p343
    %p345 = pneg %p344
    // Predicated region
    $region53: #{tpu_custom_call.1} parent=5 // pred_check
      _
    $region54: #{tpu_custom_call.1} parent=5 // pred_check_branch
      %347 = sbr.rel (%p344) target = $region56
    $region55: #{tpu_custom_call.1} parent=5 // pred_region
      %s348 = ssub.s32 %s18, 1
      %s349 = smul.u32 8, %s23
      %p350 = scmp.lt.s32.totalorder %s349, 15
      %s351 = scalar_select %p350, %s349, 15
      %s352 = smul.addr %s351, 8
      %s353 = scalar_lea.vmem %s0, %s352
      %p354 = pneg %p44
      %p355 = pneg %p41
      %p356 = pneg %p65
      %p357 = pneg %p62
      %p358 = pneg %p86
      %p359 = pneg %p83
      %p360 = pneg %p107
      %p361 = pneg %p104
      %p362 = pneg %p128
      %p363 = pneg %p125
      %p364 = pneg %p149
      %p365 = pneg %p146
      %p366 = pneg %p170
      %p367 = pneg %p167
      %p368 = pneg %p191
      %p369 = pneg %p188
      %p370 = pneg %p212
      %p371 = pneg %p209
      %p372 = pneg %p238
      %p373 = pneg %p235
      %s374 = smul.u32 8, %s23
      %p375 = scmp.lt.s32.totalorder %s374, 15
      %s376 = scalar_select %p375, %s374, 15
      %s377 = smul.addr %s376, 4
      %s378 = scalar_lea.vmem %s9, %s377
      %p379 = pneg %p264
      %p380 = pneg %p261
      %s381 = smul.u32 8, %s23
      %p382 = scmp.lt.s32.totalorder %s381, 15
      %s383 = scalar_select %p382, %s381, 15
      %s384 = smul.addr %s383, 4
      %s385 = scalar_lea.vmem %s10, %s384
      %p386 = pneg %p290
      %p387 = pneg %p287
      %s388 = smul.u32 8, %s23
      %p389 = scmp.lt.s32.totalorder %s388, 15
      %s390 = scalar_select %p389, %s388, 15
      %s391 = smul.addr %s390, 4
      %s392 = scalar_lea.vmem %s11, %s391
      %s393 = smul.u32 8, %s23
      %p394 = scmp.lt.s32.totalorder %s393, 15
      %s395 = scalar_select %p394, %s393, 15
      %s396 = smul.addr %s395, 8
      %s397 = scalar_lea.vmem %s0, %s396
      %s398 = smul.u32 8, %s23
      %s399 = smul.u32 8, %s23
      %p400 = scmp.lt.s32.totalorder %s399, 15
      %s401 = scalar_select %p400, %s399, 15
      %s402 = smul.addr %s401, 4
      %s403 = scalar_lea.vmem %s9, %s402
      %s404 = smul.u32 8, %s23
      %s405 = smul.u32 8, %s23
      %p406 = scmp.lt.s32.totalorder %s405, 15
      %s407 = scalar_select %p406, %s405, 15
      %s408 = smul.addr %s407, 4
      %s409 = scalar_lea.vmem %s10, %s408
      %s410 = smul.u32 8, %s23
      %s411 = smul.u32 8, %s23
      %p412 = scmp.lt.s32.totalorder %s411, 15
      %s413 = scalar_select %p412, %s411, 15
      %s414 = smul.addr %s413, 4
      %s415 = scalar_lea.vmem %s11, %s414
      %s416 = smul.u32 8, %s23
      %v418 = vld [vmem:[%s397] sm:$0xff]
      %v419 = vld [vmem:[%s397 + $0x8] sm:$0xff]
      %v420 = vld [vmem:[%s397 + $0x10] sm:$0xff]
      %v421 = vld [vmem:[%s397 + $0x18] sm:$0xff]
      %v422 = vld [vmem:[%s397 + $0x20] sm:$0xff]
      %v423 = vld [vmem:[%s397 + $0x28] sm:$0xff]
      %v424 = vld [vmem:[%s397 + $0x30] sm:$0xff]
      %v425 = vld [vmem:[%s397 + $0x38] sm:$0xff]
      %vm426 = vcmask 261120
      %v427 = vsel %vm426, %v418, 0.0
      %428 = vadd.xlane.f32.xlu0 %v427
      %v429 = vpop.xlane.xlu0 %428
      %v430 = vsel %vm426, %v419, 0.0
      %431 = vadd.xlane.f32.xlu0 %v430
      %v432 = vpop.xlane.xlu0 %431
      %v433 = vsel %vm426, %v420, 0.0
      %434 = vadd.xlane.f32.xlu0 %v433
      %v435 = vpop.xlane.xlu0 %434
      %v436 = vsel %vm426, %v421, 0.0
      %437 = vadd.xlane.f32.xlu0 %v436
      %v438 = vpop.xlane.xlu0 %437
      %v439 = vsel %vm426, %v422, 0.0
      %440 = vadd.xlane.f32.xlu0 %v439
      %v441 = vpop.xlane.xlu0 %440
      %v442 = vsel %vm426, %v423, 0.0
      %443 = vadd.xlane.f32.xlu0 %v442
      %v444 = vpop.xlane.xlu0 %443
      %v445 = vsel %vm426, %v424, 0.0
      %446 = vadd.xlane.f32.xlu0 %v445
      %v447 = vpop.xlane.xlu0 %446
      %v448 = vsel %vm426, %v425, 0.0
      %449 = vadd.xlane.f32.xlu0 %v448
      %v450 = vpop.xlane.xlu0 %449
      %v451 = vrcp.pop 32.0
      %v452 = vmul.f32 %v429, %v451
      %v453 = vmul.f32 %v432, %v451
      %v454 = vmul.f32 %v435, %v451
      %v455 = vmul.f32 %v438, %v451
      %v456 = vmul.f32 %v441, %v451
      %v457 = vmul.f32 %v444, %v451
      %v458 = vmul.f32 %v447, %v451
      %v459 = vmul.f32 %v450, %v451
      %v460 = vsub.f32 %v418, %v452
      %v461 = vsub.f32 %v419, %v453
      %v462 = vsub.f32 %v420, %v454
      %v463 = vsub.f32 %v421, %v455
      %v464 = vsub.f32 %v422, %v456
      %v465 = vsub.f32 %v423, %v457
      %v466 = vsub.f32 %v424, %v458
      %v467 = vsub.f32 %v425, %v459
      %v468 = vmul.f32 %v460, %v460
      %v469 = vmul.f32 %v461, %v461
      %v470 = vmul.f32 %v462, %v462
      %v471 = vmul.f32 %v463, %v463
      %v472 = vmul.f32 %v464, %v464
      %v473 = vmul.f32 %v465, %v465
      %v474 = vmul.f32 %v466, %v466
      %v475 = vmul.f32 %v467, %v467
      %v476 = vsel %vm426, %v468, 0.0
      %477 = vadd.xlane.f32.xlu0 %v476
      %v478 = vpop.xlane.xlu0 %477
      %v479 = vsel %vm426, %v469, 0.0
      %480 = vadd.xlane.f32.xlu0 %v479
      %v481 = vpop.xlane.xlu0 %480
      %v482 = vsel %vm426, %v470, 0.0
      %483 = vadd.xlane.f32.xlu0 %v482
      %v484 = vpop.xlane.xlu0 %483
      %v485 = vsel %vm426, %v471, 0.0
      %486 = vadd.xlane.f32.xlu0 %v485
      %v487 = vpop.xlane.xlu0 %486
      %v488 = vsel %vm426, %v472, 0.0
      %489 = vadd.xlane.f32.xlu0 %v488
      %v490 = vpop.xlane.xlu0 %489
      %v491 = vsel %vm426, %v473, 0.0
      %492 = vadd.xlane.f32.xlu0 %v491
      %v493 = vpop.xlane.xlu0 %492
      %v494 = vsel %vm426, %v474, 0.0
      %495 = vadd.xlane.f32.xlu0 %v494
      %v496 = vpop.xlane.xlu0 %495
      %v497 = vsel %vm426, %v475, 0.0
      %498 = vadd.xlane.f32.xlu0 %v497
      %v499 = vpop.xlane.xlu0 %498
      %v500 = vmul.f32 %v478, %v451
      %v501 = vmul.f32 %v481, %v451
      %v502 = vmul.f32 %v484, %v451
      %v503 = vmul.f32 %v487, %v451
      %v504 = vmul.f32 %v490, %v451
      %v505 = vmul.f32 %v493, %v451
      %v506 = vmul.f32 %v496, %v451
      %v507 = vmul.f32 %v499, %v451
      %v508 = vadd.f32 %v500, 1e-05
      %v509 = vadd.f32 %v501, 1e-05
      %v510 = vadd.f32 %v502, 1e-05
      %v511 = vadd.f32 %v503, 1e-05
      %v512 = vadd.f32 %v504, 1e-05
      %v513 = vadd.f32 %v505, 1e-05
      %v514 = vadd.f32 %v506, 1e-05
      %v515 = vadd.f32 %v507, 1e-05
      %v516 = vrsqrt.pop %v508
      %v517 = vrsqrt.pop %v509
      %v518 = vrsqrt.pop %v510
      %v519 = vrsqrt.pop %v511
      %v520 = vrsqrt.pop %v512
      %v521 = vrsqrt.pop %v513
      %v522 = vrsqrt.pop %v514
      %v523 = vrsqrt.pop %v515
      %v524 = vmul.f32 %v460, %v516
      %v525 = vmul.f32 %v461, %v517
      %v526 = vmul.f32 %v462, %v518
      %v527 = vmul.f32 %v463, %v519
      %v528 = vmul.f32 %v464, %v520
      %v529 = vmul.f32 %v465, %v521
      %v530 = vmul.f32 %v466, %v522
      %v531 = vmul.f32 %v467, %v523
      %v532 = vld [vmem:[%s1] sm:$0x1]
      %v534 = vlaneseq
      %v535 = vshrl.u32 %v534, 7
      %v536 = vsub.s32 0, %v535
      %v537 = vrot.slane %v532, %v536
      %v539 = vmul.f32 %v524, %v537
      %v540 = vmul.f32 %v525, %v537
      %v541 = vmul.f32 %v526, %v537
      %v542 = vmul.f32 %v527, %v537
      %v543 = vmul.f32 %v528, %v537
      %v544 = vmul.f32 %v529, %v537
      %v545 = vmul.f32 %v530, %v537
      %v546 = vmul.f32 %v531, %v537
      %v547 = vld [vmem:[%s2] sm:$0x1]
      %v549 = vlaneseq
      %v550 = vshrl.u32 %v549, 7
      %v551 = vsub.s32 0, %v550
      %v552 = vrot.slane %v547, %v551
      %v554 = vadd.f32 %v539, %v552
      %v555 = vadd.f32 %v540, %v552
      %v556 = vadd.f32 %v541, %v552
      %v557 = vadd.f32 %v542, %v552
      %v558 = vadd.f32 %v543, %v552
      %v559 = vadd.f32 %v544, %v552
      %v560 = vadd.f32 %v545, %v552
      %v561 = vadd.f32 %v546, %v552
      %v562 = vpack.c.bf16 %v555, %v554
      %v563 = vpack.c.bf16 %v557, %v556
      %v564 = vpack.c.bf16 %v559, %v558
      %v565 = vpack.c.bf16 %v561, %v560
      %v566 = vld [vmem:[%s3] sm:$0xf]
      %v567 = vld [vmem:[%s3 + $0x4] sm:$0xf]
      %v568 = vld [vmem:[%s3 + $0x8] sm:$0xf]
      %v569 = vld [vmem:[%s3 + $0xc] sm:$0xf]
      %v570 = vld [vmem:[%s4] sm:$0x1]
      %v572 = vlaneseq
      %v573 = vshrl.u32 %v572, 7
      %v574 = vsub.s32 0, %v573
      %v575 = vrot.slane %v570, %v574
      %v581 = vunpack.c.l.b16 %v566
      %v582 = vunpack.c.l.b16 %v567
      %v583 = vunpack.c.l.b16 %v568
      %v584 = vunpack.c.l.b16 %v569
      %v585 = vpack.c.b16 %v582, %v581
      %v586 = vpack.c.b16 %v584, %v583
      %v590 = vsel %vm426, %v562, 0
      %v593 = vsel %vm426, %v563, 0
      %v596 = vsel %vm426, %v564, 0
      %v599 = vsel %vm426, %v565, 0
      %601 = vmatprep.subr.bf16.mxu0 0
      %602 = vmatpush1.bf16.msra.mxu0 %v585
      %603 = vmatprep.subr.bf16.mxu0 0
      %604 = vmatpush1.bf16.msra.mxu0 %v586
      %605 = vmatprep.subr.bf16.mxu0 0
      %606 = vmatpush1.bf16.msra.mxu0 0
      %607 = vmatprep.subr.bf16.mxu0 0
      %608 = vmatpush1.bf16.msra.mxu0 0
      %609 = vmatprep.subr.bf16.mxu0 0
      %610 = vmatpush1.bf16.msra.mxu0 0
      %611 = vmatprep.subr.bf16.mxu0 0
      %612 = vmatpush1.bf16.msra.mxu0 0
      %613 = vmatprep.subr.bf16.mxu0 0
      %614 = vmatpush1.bf16.msra.mxu0 0
      %615 = vmatprep.subr.bf16.mxu0 0
      %616 = vmatpush1.bf16.msra.mxu0 0
      %617 = vmatprep.subr.bf16.mxu0 0
      %618 = vmatpush1.bf16.msra.mxu0 0
      %619 = vmatprep.subr.bf16.mxu0 0
      %620 = vmatpush1.bf16.msra.mxu0 0
      %621 = vmatprep.subr.bf16.mxu0 0
      %622 = vmatpush1.bf16.msra.mxu0 0
      %623 = vmatprep.subr.bf16.mxu0 0
      %624 = vmatpush1.bf16.msra.mxu0 0
      %625 = vmatprep.subr.bf16.mxu0 0
      %626 = vmatpush1.bf16.msra.mxu0 0
      %627 = vmatprep.subr.bf16.mxu0 0
      %628 = vmatpush1.bf16.msra.mxu0 0
      %629 = vmatprep.subr.bf16.mxu0 0
      %630 = vmatpush1.bf16.msra.mxu0 0
      %631 = vmatprep.subr.bf16.mxu0 0
      %632 = vmatpush1.bf16.msra.mxu0 0
      %633 = vmatprep.mubr.bf16.mxu0 0
      %634 = vmatmul.mubr.bf16.gmra.mrb[0].mxu0 %v590
      %v635 = vpop.f32.mrb[0].mxu0
      %v636 = vadd.f32 %v575, %v635
      %v637 = vpop.f32.mrb[0].mxu0
      %v638 = vpop.f32.mrb[0].mxu0
      %v639 = vadd.f32 %v575, %v638
      %v640 = vpop.f32.mrb[0].mxu0
      %641 = vmatprep.mubr.bf16.mxu0 0
      %642 = vmatmul.mubr.bf16.gmra.mrb[0].mxu0 %v593
      %v643 = vpop.f32.mrb[0].mxu0
      %v644 = vadd.f32 %v575, %v643
      %v645 = vpop.f32.mrb[0].mxu0
      %v646 = vpop.f32.mrb[0].mxu0
      %v647 = vadd.f32 %v575, %v646
      %v648 = vpop.f32.mrb[0].mxu0
      %649 = vmatprep.mubr.bf16.mxu0 0
      %650 = vmatmul.mubr.bf16.gmra.mrb[0].mxu0 %v596
      %v651 = vpop.f32.mrb[0].mxu0
      %v652 = vadd.f32 %v575, %v651
      %v653 = vpop.f32.mrb[0].mxu0
      %v654 = vpop.f32.mrb[0].mxu0
      %v655 = vadd.f32 %v575, %v654
      %v656 = vpop.f32.mrb[0].mxu0
      %657 = vmatprep.mubr.bf16.mxu0 0
      %658 = vmatmul.mubr.bf16.gmra.mrb[0].mxu0 %v599
      %v659 = vpop.f32.mrb[0].mxu0
      %v660 = vadd.f32 %v575, %v659
      %v661 = vpop.f32.mrb[0].mxu0
      %v662 = vpop.f32.mrb[0].mxu0
      %v663 = vadd.f32 %v575, %v662
      %v664 = vpop.f32.mrb[0].mxu0
      %665 = vdwg.mxu0
      %v666 = vpack.c.bf16 %v639, %v636
      %v667 = vpack.c.bf16 %v647, %v644
      %v668 = vpack.c.bf16 %v655, %v652
      %v669 = vpack.c.bf16 %v663, %v660
      %v674 = vunpack.c.l.b16 %v666
      %v675 = vunpack.c.h.b16 %v666
      %v676 = vunpack.c.l.b16 %v667
      %v677 = vunpack.c.h.b16 %v667
      %v678 = vunpack.c.l.b16 %v668
      %v679 = vunpack.c.h.b16 %v668
      %v680 = vunpack.c.l.b16 %v669
      %v681 = vunpack.c.h.b16 %v669
      %v682 = vpack.c.b16 %v674, %v674
      %v683 = vpack.c.b16 %v675, %v675
      %v684 = vpack.c.b16 %v676, %v676
      %v685 = vpack.c.b16 %v677, %v677
      %v686 = vpack.c.b16 %v678, %v678
      %v687 = vpack.c.b16 %v679, %v679
      %v688 = vpack.c.b16 %v680, %v680
      %v689 = vpack.c.b16 %v681, %v681
      %vm698 = vcmask 257024
      %699 = vst.msk [vmem:[%s403] sm:$0xf] %vm698, %v682
      %700 = vst.msk [vmem:[%s403 + $0x4] sm:$0xf] %vm698, %v683
      %701 = vst.msk [vmem:[%s403 + $0x8] sm:$0xf] %vm698, %v684
      %702 = vst.msk [vmem:[%s403 + $0xc] sm:$0xf] %vm698, %v685
      %703 = vst.msk [vmem:[%s403 + $0x10] sm:$0xf] %vm698, %v686
      %704 = vst.msk [vmem:[%s403 + $0x14] sm:$0xf] %vm698, %v687
      %705 = vst.msk [vmem:[%s403 + $0x18] sm:$0xf] %vm698, %v688
      %706 = vst.msk [vmem:[%s403 + $0x1c] sm:$0xf] %vm698, %v689
      %v707 = vld [vmem:[%s5] sm:$0xf]
      %v708 = vld [vmem:[%s5 + $0x4] sm:$0xf]
      %v709 = vld [vmem:[%s5 + $0x8] sm:$0xf]
      %v710 = vld [vmem:[%s5 + $0xc] sm:$0xf]
      %v711 = vld [vmem:[%s6] sm:$0x1]
      %v713 = vlaneseq
      %v714 = vshrl.u32 %v713, 7
      %v715 = vsub.s32 0, %v714
      %v716 = vrot.slane %v711, %v715
      %v722 = vunpack.c.l.b16 %v707
      %v723 = vunpack.c.l.b16 %v708
      %v724 = vunpack.c.l.b16 %v709
      %v725 = vunpack.c.l.b16 %v710
      %v726 = vpack.c.b16 %v723, %v722
      %v727 = vpack.c.b16 %v725, %v724
      %730 = vmatprep.subr.bf16.mxu0 0
      %731 = vmatpush1.bf16.msra.mxu0 %v726
      %732 = vmatprep.subr.bf16.mxu0 0
      %733 = vmatpush1.bf16.msra.mxu0 %v727
      %734 = vmatprep.subr.bf16.mxu0 0
      %735 = vmatpush1.bf16.msra.mxu0 0
      %736 = vmatprep.subr.bf16.mxu0 0
      %737 = vmatpush1.bf16.msra.mxu0 0
      %738 = vmatprep.subr.bf16.mxu0 0
      %739 = vmatpush1.bf16.msra.mxu0 0
      %740 = vmatprep.subr.bf16.mxu0 0
      %741 = vmatpush1.bf16.msra.mxu0 0
      %742 = vmatprep.subr.bf16.mxu0 0
      %743 = vmatpush1.bf16.msra.mxu0 0
      %744 = vmatprep.subr.bf16.mxu0 0
      %745 = vmatpush1.bf16.msra.mxu0 0
      %746 = vmatprep.subr.bf16.mxu0 0
      %747 = vmatpush1.bf16.msra.mxu0 0
      %748 = vmatprep.subr.bf16.mxu0 0
      %749 = vmatpush1.bf16.msra.mxu0 0
      %750 = vmatprep.subr.bf16.mxu0 0
      %751 = vmatpush1.bf16.msra.mxu0 0
      %752 = vmatprep.subr.bf16.mxu0 0
      %753 = vmatpush1.bf16.msra.mxu0 0
      %754 = vmatprep.subr.bf16.mxu0 0
      %755 = vmatpush1.bf16.msra.mxu0 0
      %756 = vmatprep.subr.bf16.mxu0 0
      %757 = vmatpush1.bf16.msra.mxu0 0
      %758 = vmatprep.subr.bf16.mxu0 0
      %759 = vmatpush1.bf16.msra.mxu0 0
      %760 = vmatprep.subr.bf16.mxu0 0
      %761 = vmatpush1.bf16.msra.mxu0 0
      %762 = vmatprep.mubr.bf16.mxu0 0
      %763 = vmatmul.mubr.bf16.gmra.mrb[0].mxu0 %v590
      %v764 = vpop.f32.mrb[0].mxu0
      %v765 = vadd.f32 %v716, %v764
      %v766 = vpop.f32.mrb[0].mxu0
      %v767 = vpop.f32.mrb[0].mxu0
      %v768 = vadd.f32 %v716, %v767
      %v769 = vpop.f32.mrb[0].mxu0
      %770 = vmatprep.mubr.bf16.mxu0 0
      %771 = vmatmul.mubr.bf16.gmra.mrb[0].mxu0 %v593
      %v772 = vpop.f32.mrb[0].mxu0
      %v773 = vadd.f32 %v716, %v772
      %v774 = vpop.f32.mrb[0].mxu0
      %v775 = vpop.f32.mrb[0].mxu0
      %v776 = vadd.f32 %v716, %v775
      %v777 = vpop.f32.mrb[0].mxu0
      %778 = vmatprep.mubr.bf16.mxu0 0
      %779 = vmatmul.mubr.bf16.gmra.mrb[0].mxu0 %v596
      %v780 = vpop.f32.mrb[0].mxu0
      %v781 = vadd.f32 %v716, %v780
      %v782 = vpop.f32.mrb[0].mxu0
      %v783 = vpop.f32.mrb[0].mxu0
      %v784 = vadd.f32 %v716, %v783
      %v785 = vpop.f32.mrb[0].mxu0
      %786 = vmatprep.mubr.bf16.mxu0 0
      %787 = vmatmul.mubr.bf16.gmra.mrb[0].mxu0 %v599
      %v788 = vpop.f32.mrb[0].mxu0
      %v789 = vadd.f32 %v716, %v788
      %v790 = vpop.f32.mrb[0].mxu0
      %v791 = vpop.f32.mrb[0].mxu0
      %v792 = vadd.f32 %v716, %v791
      %v793 = vpop.f32.mrb[0].mxu0
      %794 = vdwg.mxu0
      %v795 = vpack.c.bf16 %v768, %v765
      %v796 = vpack.c.bf16 %v776, %v773
      %v797 = vpack.c.bf16 %v784, %v781
      %v798 = vpack.c.bf16 %v792, %v789
      %v803 = vunpack.c.l.b16 %v795
      %v804 = vunpack.c.h.b16 %v795
      %v805 = vunpack.c.l.b16 %v796
      %v806 = vunpack.c.h.b16 %v796
      %v807 = vunpack.c.l.b16 %v797
      %v808 = vunpack.c.h.b16 %v797
      %v809 = vunpack.c.l.b16 %v798
      %v810 = vunpack.c.h.b16 %v798
      %v811 = vpack.c.b16 %v803, %v803
      %v812 = vpack.c.b16 %v804, %v804
      %v813 = vpack.c.b16 %v805, %v805
      %v814 = vpack.c.b16 %v806, %v806
      %v815 = vpack.c.b16 %v807, %v807
      %v816 = vpack.c.b16 %v808, %v808
      %v817 = vpack.c.b16 %v809, %v809
      %v818 = vpack.c.b16 %v810, %v810
      %827 = vst.msk [vmem:[%s409] sm:$0xf] %vm698, %v811
      %828 = vst.msk [vmem:[%s409 + $0x4] sm:$0xf] %vm698, %v812
      %829 = vst.msk [vmem:[%s409 + $0x8] sm:$0xf] %vm698, %v813
      %830 = vst.msk [vmem:[%s409 + $0xc] sm:$0xf] %vm698, %v814
      %831 = vst.msk [vmem:[%s409 + $0x10] sm:$0xf] %vm698, %v815
      %832 = vst.msk [vmem:[%s409 + $0x14] sm:$0xf] %vm698, %v816
      %833 = vst.msk [vmem:[%s409 + $0x18] sm:$0xf] %vm698, %v817
      %834 = vst.msk [vmem:[%s409 + $0x1c] sm:$0xf] %vm698, %v818
      %v835 = vld [vmem:[%s7] sm:$0xf]
      %v836 = vld [vmem:[%s7 + $0x4] sm:$0xf]
      %v837 = vld [vmem:[%s7 + $0x8] sm:$0xf]
      %v838 = vld [vmem:[%s7 + $0xc] sm:$0xf]
      %v839 = vld [vmem:[%s8] sm:$0x1]
      %v841 = vlaneseq
      %v842 = vshrl.u32 %v841, 7
      %v843 = vsub.s32 0, %v842
      %v844 = vrot.slane %v839, %v843
      %v850 = vunpack.c.l.b16 %v835
      %v851 = vunpack.c.l.b16 %v836
      %v852 = vunpack.c.l.b16 %v837
      %v853 = vunpack.c.l.b16 %v838
      %v854 = vpack.c.b16 %v851, %v850
      %v855 = vpack.c.b16 %v853, %v852
      %858 = vmatprep.subr.bf16.mxu0 0
      %859 = vmatpush1.bf16.msra.mxu0 %v854
      %860 = vmatprep.subr.bf16.mxu0 0
      %861 = vmatpush1.bf16.msra.mxu0 %v855
      %862 = vmatprep.subr.bf16.mxu0 0
      %863 = vmatpush1.bf16.msra.mxu0 0
      %864 = vmatprep.subr.bf16.mxu0 0
      %865 = vmatpush1.bf16.msra.mxu0 0
      %866 = vmatprep.subr.bf16.mxu0 0
      %867 = vmatpush1.bf16.msra.mxu0 0
      %868 = vmatprep.subr.bf16.mxu0 0
      %869 = vmatpush1.bf16.msra.mxu0 0
      %870 = vmatprep.subr.bf16.mxu0 0
      %871 = vmatpush1.bf16.msra.mxu0 0
      %872 = vmatprep.subr.bf16.mxu0 0
      %873 = vmatpush1.bf16.msra.mxu0 0
      %874 = vmatprep.subr.bf16.mxu0 0
      %875 = vmatpush1.bf16.msra.mxu0 0
      %876 = vmatprep.subr.bf16.mxu0 0
      %877 = vmatpush1.bf16.msra.mxu0 0
      %878 = vmatprep.subr.bf16.mxu0 0
      %879 = vmatpush1.bf16.msra.mxu0 0
      %880 = vmatprep.subr.bf16.mxu0 0
      %881 = vmatpush1.bf16.msra.mxu0 0
      %882 = vmatprep.subr.bf16.mxu0 0
      %883 = vmatpush1.bf16.msra.mxu0 0
      %884 = vmatprep.subr.bf16.mxu0 0
      %885 = vmatpush1.bf16.msra.mxu0 0
      %886 = vmatprep.subr.bf16.mxu0 0
      %887 = vmatpush1.bf16.msra.mxu0 0
      %888 = vmatprep.subr.bf16.mxu0 0
      %889 = vmatpush1.bf16.msra.mxu0 0
      %890 = vmatprep.mubr.bf16.mxu0 0
      %891 = vmatmul.mubr.bf16.gmra.mrb[0].mxu0 %v590
      %v892 = vpop.f32.mrb[0].mxu0
      %v893 = vadd.f32 %v844, %v892
      %v894 = vpop.f32.mrb[0].mxu0
      %v895 = vpop.f32.mrb[0].mxu0
      %v896 = vadd.f32 %v844, %v895
      %v897 = vpop.f32.mrb[0].mxu0
      %898 = vmatprep.mubr.bf16.mxu0 0
      %899 = vmatmul.mubr.bf16.gmra.mrb[0].mxu0 %v593
      %v900 = vpop.f32.mrb[0].mxu0
      %v901 = vadd.f32 %v844, %v900
      %v902 = vpop.f32.mrb[0].mxu0
      %v903 = vpop.f32.mrb[0].mxu0
      %v904 = vadd.f32 %v844, %v903
      %v905 = vpop.f32.mrb[0].mxu0
      %906 = vmatprep.mubr.bf16.mxu0 0
      %907 = vmatmul.mubr.bf16.gmra.mrb[0].mxu0 %v596
      %v908 = vpop.f32.mrb[0].mxu0
      %v909 = vadd.f32 %v844, %v908
      %v910 = vpop.f32.mrb[0].mxu0
      %v911 = vpop.f32.mrb[0].mxu0
      %v912 = vadd.f32 %v844, %v911
      %v913 = vpop.f32.mrb[0].mxu0
      %914 = vmatprep.mubr.bf16.mxu0 0
      %915 = vmatmul.mubr.bf16.gmra.mrb[0].mxu0 %v599
      %v916 = vpop.f32.mrb[0].mxu0
      %v917 = vadd.f32 %v844, %v916
      %v918 = vpop.f32.mrb[0].mxu0
      %v919 = vpop.f32.mrb[0].mxu0
      %v920 = vadd.f32 %v844, %v919
      %v921 = vpop.f32.mrb[0].mxu0
      %922 = vdwg.mxu0
      %v923 = vpack.c.bf16 %v896, %v893
      %v924 = vpack.c.bf16 %v904, %v901
      %v925 = vpack.c.bf16 %v912, %v909
      %v926 = vpack.c.bf16 %v920, %v917
      %v931 = vunpack.c.l.b16 %v923
      %v932 = vunpack.c.h.b16 %v923
      %v933 = vunpack.c.l.b16 %v924
      %v934 = vunpack.c.h.b16 %v924
      %v935 = vunpack.c.l.b16 %v925
      %v936 = vunpack.c.h.b16 %v925
      %v937 = vunpack.c.l.b16 %v926
      %v938 = vunpack.c.h.b16 %v926
      %v939 = vpack.c.b16 %v931, %v931
      %v940 = vpack.c.b16 %v932, %v932
      %v941 = vpack.c.b16 %v933, %v933
      %v942 = vpack.c.b16 %v934, %v934
      %v943 = vpack.c.b16 %v935, %v935
      %v944 = vpack.c.b16 %v936, %v936
      %v945 = vpack.c.b16 %v937, %v937
      %v946 = vpack.c.b16 %v938, %v938
      %955 = vst.msk [vmem:[%s415] sm:$0xf] %vm698, %v939
      %956 = vst.msk [vmem:[%s415 + $0x4] sm:$0xf] %vm698, %v940
      %957 = vst.msk [vmem:[%s415 + $0x8] sm:$0xf] %vm698, %v941
      %958 = vst.msk [vmem:[%s415 + $0xc] sm:$0xf] %vm698, %v942
      %959 = vst.msk [vmem:[%s415 + $0x10] sm:$0xf] %vm698, %v943
      %960 = vst.msk [vmem:[%s415 + $0x14] sm:$0xf] %vm698, %v944
      %961 = vst.msk [vmem:[%s415 + $0x18] sm:$0xf] %vm698, %v945
      %962 = vst.msk [vmem:[%s415 + $0x1c] sm:$0xf] %vm698, %v946
      %s963 = smul.u32 8, %s23
      %p964 = scmp.lt.s32.totalorder %s963, 15
      %s965 = scalar_select %p964, %s963, 15
      %s966 = smul.addr %s965, 4
      %s967 = scalar_lea.vmem %s9, %s966
      %s968 = smul.u32 8, %s23
      %p969 = scmp.lt.s32.totalorder %s968, 15
      %s970 = scalar_select %p969, %s968, 15
      %s971 = smul.addr %s970, 4
      %s972 = scalar_lea.vmem %s10, %s971
      %s973 = smul.u32 8, %s23
      %p974 = scmp.lt.s32.totalorder %s973, 15
      %s975 = scalar_select %p974, %s973, 15
      %s976 = smul.addr %s975, 4
      %s977 = scalar_lea.vmem %s11, %s976
      // Predicated region
      $region57: #{tpu_custom_call.1} parent=55 // pred_check
        %p978 = pneg %p235
      $region58: #{tpu_custom_call.1} parent=55 // pred_check_branch
        %980 = sbr.rel (%p978) target = $region60
      $region59: #{tpu_custom_call.1} parent=55 // pred_region
        %s981 = smul.u32 8, %s23
      $region60: #{tpu_custom_call.1} parent=55 // pred_fallthru
        _
      // Predicated region
      $region61: #{tpu_custom_call.1} parent=55 // pred_check
        %p982 = pneg %p261
      $region62: #{tpu_custom_call.1} parent=55 // pred_check_branch
        %984 = sbr.rel (%p982) target = $region64
      $region63: #{tpu_custom_call.1} parent=55 // pred_region
        %s985 = smul.u32 8, %s23
      $region64: #{tpu_custom_call.1} parent=55 // pred_fallthru
        _
      // Predicated region
      $region65: #{tpu_custom_call.1} parent=55 // pred_check
        %p986 = pneg %p287
      $region66: #{tpu_custom_call.1} parent=55 // pred_check_branch
        %988 = sbr.rel (%p986) target = $region68
      $region67: #{tpu_custom_call.1} parent=55 // pred_region
        %s989 = smul.u32 8, %s23
      $region68: #{tpu_custom_call.1} parent=55 // pred_fallthru
        _
    $region56: #{tpu_custom_call.1} parent=5 // pred_fallthru
      _
    %p990 = scmp.le.s32.totalorder 2, %s18
    // Predicated region
    $region69: #{tpu_custom_call.1} parent=5 // pred_check
      %p991 = pneg %p990
    $region70: #{tpu_custom_call.1} parent=5 // pred_check_branch
      %993 = sbr.rel (%p991) target = $region72
    $region71: #{tpu_custom_call.1} parent=5 // pred_region
      %s994 = ssub.s32 %s18, 2
      // Predicated region
      $region73: #{tpu_custom_call.1} parent=71 // pred_check
        %p995 = pneg %p241
      $region74: #{tpu_custom_call.1} parent=71 // pred_check_branch
        %997 = sbr.rel (%p995) target = $region76
      $region75: #{tpu_custom_call.1} parent=71 // pred_region
        %s998 = smul.u32 8, %s24
        %p999 = scmp.lt.s32.totalorder %s998, 15
        %s1000 = scalar_select %p999, %s998, 15
        %s1001 = smul.addr %s1000, 4
        %s1002 = scalar_lea.vmem %s9, %s1001
      $region76: #{tpu_custom_call.1} parent=71 // pred_fallthru
        _
      // Predicated region
      $region77: #{tpu_custom_call.1} parent=71 // pred_check
        %p1003 = pneg %p267
      $region78: #{tpu_custom_call.1} parent=71 // pred_check_branch
        %1005 = sbr.rel (%p1003) target = $region80
      $region79: #{tpu_custom_call.1} parent=71 // pred_region
        %s1006 = smul.u32 8, %s24
        %p1007 = scmp.lt.s32.totalorder %s1006, 15
        %s1008 = scalar_select %p1007, %s1006, 15
        %s1009 = smul.addr %s1008, 4
        %s1010 = scalar_lea.vmem %s10, %s1009
      $region80: #{tpu_custom_call.1} parent=71 // pred_fallthru
        _
      // Predicated region
      $region81: #{tpu_custom_call.1} parent=71 // pred_check
        %p1011 = pneg %p293
      $region82: #{tpu_custom_call.1} parent=71 // pred_check_branch
        %1013 = sbr.rel (%p1011) target = $region84
      $region83: #{tpu_custom_call.1} parent=71 // pred_region
        %s1014 = smul.u32 8, %s24
        %p1015 = scmp.lt.s32.totalorder %s1014, 15
        %s1016 = scalar_select %p1015, %s1014, 15
        %s1017 = smul.addr %s1016, 4
        %s1018 = scalar_lea.vmem %s11, %s1017
      $region84: #{tpu_custom_call.1} parent=71 // pred_fallthru
        _
    $region72: #{tpu_custom_call.1} parent=5 // pred_fallthru
      _
  $region6: #{tpu_custom_call.1} parent=0 // loop_footer
    %s22 = sadd.s32 1, %s18
  $region7: #{tpu_custom_call.1} parent=0 // loop_footer_branch
    %17 = sbr.rel target = $region3
  $region8: #{tpu_custom_call.1} parent=0 // loop_exit
    _

</llo_original>
